<compile_context>
chip_gen: v5e
topology: v5e:2x2
jax: 0.10.0
libtpu: 0.0.40
codegen_flags: <defaults>
</compile_context>

<pallas_src>
import functools

import jax
import jax.numpy as jnp
from jax.experimental import pallas as pl
from jax.experimental.pallas import tpu as pltpu

_LANE = 128
_SUBLANE = 8
_MAX_TK = 2048                          # K-tile width (lanes), multiple of 128
_TILE_TARGET_BYTES = 8 * 1024 * 1024    # per input buffer (x2 for double buffering)


def _ce_loss_kernel(x_ref, loss_ref, m_sc, l_sc, x0_sc, *, K, TK):
    """Per-row CrossEntropy(x, label=0) via online logsumexp over K tiles."""
    k = pl.program_id(1)
    nk = pl.num_programs(1)

    x = x_ref[...].astype(jnp.float32)                      # (TB, TK)

    if K % TK != 0:
        # Ragged last K tile: mask padded lanes with -inf (exp -> 0).
        lane = jax.lax.broadcasted_iota(jnp.int32, x.shape, 1)
        x = jnp.where(k * TK + lane < K, x, -jnp.inf)

    @pl.when(k == 0)
    def _():
        m_sc[...] = jnp.full_like(m_sc, -jnp.inf)
        l_sc[...] = jnp.zeros_like(l_sc)
        x0_sc[...] = x[:, 0:1]                              # positive logit (col 0)

    m_prev = m_sc[...]
    m_new = jnp.maximum(m_prev, jnp.max(x, axis=-1, keepdims=True))
    l_sc[...] = (l_sc[...] * jnp.exp(m_prev - m_new)
                 + jnp.sum(jnp.exp(x - m_new), axis=-1, keepdims=True))
    m_sc[...] = m_new

    @pl.when(k == nk - 1)
    def _():
        loss = m_sc[...] + jnp.log(l_sc[...]) - x0_sc[...]  # (TB, 1)
        loss_ref[...] = loss.astype(loss_ref.dtype)


def _pick_tiles(B, K, itemsize, block_b, block_k):
    if block_k is None:
        TK = K if K <= _MAX_TK else _MAX_TK
    else:
        TK = block_k
    if block_b is None:
        rows = max(_SUBLANE, _TILE_TARGET_BYTES // (TK * itemsize))
        if B <= rows:
            TB = B
        else:
            TB = max(_SUBLANE, (min(rows, B) // _SUBLANE) * _SUBLANE)
    else:
        TB = block_b
    if TK != K:
        assert TK % _LANE == 0, "K tile must be a multiple of 128 lanes"
    if TB != B:
        assert TB % _SUBLANE == 0, "B tile must be a multiple of 8 sublanes"
    return TB, TK


def _per_row_ce_loss(x2, *, block_b, block_k, vmem_limit_bytes):
    B, K = x2.shape
    TB, TK = _pick_tiles(B, K, x2.dtype.itemsize, block_b, block_k)
    nb, nk = pl.cdiv(B, TB), pl.cdiv(K, TK)

    kernel = functools.partial(_ce_loss_kernel, K=K, TK=TK)
    loss = pl.pallas_call(
        kernel,
        out_shape=jax.ShapeDtypeStruct((B, 1), jnp.float32),
        grid_spec=pltpu.PrefetchScalarGridSpec(
            num_scalar_prefetch=0,
            grid=(nb, nk),
            in_specs=[pl.BlockSpec((TB, TK), lambda i, k: (i, k))],
            out_specs=pl.BlockSpec((TB, 1), lambda i, k: (i, 0)),
            scratch_shapes=[
                pltpu.VMEM((TB, 1), jnp.float32),   # running max  m
                pltpu.VMEM((TB, 1), jnp.float32),   # running sum  l
                pltpu.VMEM((TB, 1), jnp.float32),   # positive logit x[:, 0]
            ],
        ),
        compiler_params=pltpu.CompilerParams(
            dimension_semantics=("parallel", "arbitrary"),
            vmem_limit_bytes=vmem_limit_bytes,
        ),
    )(x2)
    return loss[:, 0]                                       # (B,) f32


def nce_softmax_loss_sam_threshold(x, threshold, *, block_b=None, block_k=None,
                                   vmem_limit_bytes=32 * 1024 * 1024):
    """Full forward of NCESoftmaxLoss_sam_threshold."""
    if x.ndim == 3:
        x2 = jnp.squeeze(x, axis=1)      # [bsz, 1, K] -> [bsz, K]  (bsz==1 safe)
    elif x.ndim == 2:
        x2 = x
    else:
        raise ValueError(f"expected [bsz, 1, K] or [bsz, K] logits, got {x.shape}")

    loss = _per_row_ce_loss(x2, block_b=block_b, block_k=block_k,
                            vmem_limit_bytes=vmem_limit_bytes)

    # Threshold / count / fallback epilogue on the (B,) loss vector (trivial).
    thr = jnp.asarray(threshold, dtype=jnp.float32)
    mask = loss > thr
    count = jnp.sum(mask.astype(jnp.float32))
    total = jnp.sum(jnp.where(mask, loss, 0.0))
    return jnp.where(count > 0.0, total / count, loss[0])


def _reference(x, threshold):
    # pure-JAX reference of the PyTorch semantics
    x2 = jnp.squeeze(x, axis=1) if x.ndim == 3 else x
    x2 = x2.astype(jnp.float32)
    lse = jax.nn.logsumexp(x2, axis=-1)
    loss = lse - x2[:, 0]
    mask = loss > threshold
    count = jnp.sum(mask.astype(jnp.float32))
    total = jnp.sum(jnp.where(mask, loss, 0.0))
    return jnp.where(count > 0, total / count, loss[0])


if __name__ == "__main__":
    key = jax.random.PRNGKey(0)
    bsz, K = 24, 160
    # x: [bsz, 1, K] NCE logit scores (col 0 = positive, rest = negatives)
    x = jax.random.normal(key, (bsz, 1, K), dtype=jnp.float32) * 2.0

    # 1) default tiling, thresholds exercising both branches (some / none above)
    for thr in (5.0, 100.0):
        got = nce_softmax_loss_sam_threshold(x, thr)
        jax.block_until_ready(got)
        want = _reference(x, thr)
        assert jnp.allclose(got, want, rtol=1e-5, atol=1e-5), (thr, got, want)

    # 2) forced small tiles: exercises the gridded path (parallel B tiles,
    #    online-logsumexp K tiles, ragged B and K edges).
    got = nce_softmax_loss_sam_threshold(x, 5.0, block_b=16, block_k=128)
    jax.block_until_ready(got)
    want = _reference(x, 5.0)
    assert jnp.allclose(got, want, rtol=1e-5, atol=1e-5), (got, want)

    # 3) bf16 logits kept bf16 in HBM (cast per-tile inside the kernel).
    x_bf16 = x.astype(jnp.bfloat16)
    got = nce_softmax_loss_sam_threshold(x_bf16, 5.0)
    jax.block_until_ready(got)
    want = _reference(x_bf16, 5.0)
    assert jnp.allclose(got, want, rtol=1e-4, atol=1e-4), (got, want)

    print("KERNEL_OK")
</pallas_src>

<mosaic_0001>
module attributes {stable_mosaic.version = 11 : i64} {
  func.func @_ce_loss_kernel(%arg0: i32, %arg1: i32, %arg2: memref<24x160xf32, #tpu.memory_space<vmem>>, %arg3: memref<24x1xf32, #tpu.memory_space<vmem>>, %arg4: memref<24x1xf32, #tpu.memory_space<vmem>>, %arg5: memref<24x1xf32, #tpu.memory_space<vmem>>, %arg6: memref<24x1xf32, #tpu.memory_space<vmem>>) attributes {dimension_semantics = [#tpu.dimension_semantics<parallel>, #tpu.dimension_semantics<arbitrary>], iteration_bounds = array<i64: 1, 1>, scalar_prefetch = 0 : i64, scratch_operands = 3 : i64, tpu.core_type = #tpu.core_type<tc>, window_params = [{transform_indices = @transform_0, window_bounds = array<i64: 24, 160>}, {transform_indices = @transform_1, window_bounds = array<i64: 24, 1>}]} {
    %c0 = arith.constant 0 : index
    %c0_0 = arith.constant 0 : index
    %0 = vector.load %arg2[%c0, %c0_0] : memref<24x160xf32, #tpu.memory_space<vmem>>, vector<24x160xf32>
    %c0_i32 = arith.constant 0 : i32
    %1 = arith.cmpi eq, %arg1, %c0_i32 : i32
    %2 = arith.extui %1 : i1 to i32
    %c0_i32_1 = arith.constant 0 : i32
    %3 = arith.cmpi ne, %2, %c0_i32_1 : i32
    scf.if %3 {
      %cst_13 = arith.constant 0xFF800000 : f32
      %23 = vector.broadcast %cst_13 : f32 to vector<24x1xf32>
      %c0_14 = arith.constant 0 : index
      %c0_15 = arith.constant 0 : index
      %24 = vector.load %arg4[%c0_14, %c0_15] : memref<24x1xf32, #tpu.memory_space<vmem>>, vector<24x1xf32>
      tpu.vector_store %arg4[%c0_14, %c0_15], %23 {strides = array<i32>} : memref<24x1xf32, #tpu.memory_space<vmem>>, vector<24x1xf32>,
      %cst_16 = arith.constant 0.000000e+00 : f32
      %25 = vector.broadcast %cst_16 : f32 to vector<24x1xf32>
      %c0_17 = arith.constant 0 : index
      %c0_18 = arith.constant 0 : index
      %26 = vector.load %arg5[%c0_17, %c0_18] : memref<24x1xf32, #tpu.memory_space<vmem>>, vector<24x1xf32>
      tpu.vector_store %arg5[%c0_17, %c0_18], %25 {strides = array<i32>} : memref<24x1xf32, #tpu.memory_space<vmem>>, vector<24x1xf32>,
      %27 = vector.extract_strided_slice %0 {offsets = [0, 0], sizes = [24, 1], strides = [1, 1]} : vector<24x160xf32> to vector<24x1xf32>
      %c0_19 = arith.constant 0 : index
      %c0_20 = arith.constant 0 : index
      %28 = vector.load %arg6[%c0_19, %c0_20] : memref<24x1xf32, #tpu.memory_space<vmem>>, vector<24x1xf32>
      tpu.vector_store %arg6[%c0_19, %c0_20], %27 {strides = array<i32>} : memref<24x1xf32, #tpu.memory_space<vmem>>, vector<24x1xf32>,
    } else {
    }
    %c0_2 = arith.constant 0 : index
    %c0_3 = arith.constant 0 : index
    %4 = vector.load %arg4[%c0_2, %c0_3] : memref<24x1xf32, #tpu.memory_space<vmem>>, vector<24x1xf32>
    %cst = arith.constant dense<0xFF800000> : vector<24xf32>
    %5 = vector.multi_reduction <maximumf>, %0, %cst [1] : vector<24x160xf32> to vector<24xf32>
    %6 = vector.shape_cast %5 : vector<24xf32> to vector<24x1xf32>
    %7 = arith.maximumf %4, %6 : vector<24x1xf32>
    %c0_4 = arith.constant 0 : index
    %c0_5 = arith.constant 0 : index
    %8 = vector.load %arg5[%c0_4, %c0_5] : memref<24x1xf32, #tpu.memory_space<vmem>>, vector<24x1xf32>
    %9 = arith.subf %4, %7 : vector<24x1xf32>
    %10 = math.exp %9 : vector<24x1xf32>
    %11 = arith.mulf %8, %10 : vector<24x1xf32>
    %12 = vector.broadcast %7 : vector<24x1xf32> to vector<24x160xf32>
    %13 = arith.subf %0, %12 : vector<24x160xf32>
    %14 = math.exp %13 : vector<24x160xf32>
    %cst_6 = arith.constant dense<0.000000e+00> : vector<24xf32>
    %15 = vector.multi_reduction <add>, %14, %cst_6 [1] : vector<24x160xf32> to vector<24xf32>
    %16 = vector.shape_cast %15 : vector<24xf32> to vector<24x1xf32>
    %17 = arith.addf %11, %16 : vector<24x1xf32>
    %c0_7 = arith.constant 0 : index
    %c0_8 = arith.constant 0 : index
    %18 = vector.load %arg5[%c0_7, %c0_8] : memref<24x1xf32, #tpu.memory_space<vmem>>, vector<24x1xf32>
    tpu.vector_store %arg5[%c0_7, %c0_8], %17 {strides = array<i32>} : memref<24x1xf32, #tpu.memory_space<vmem>>, vector<24x1xf32>,
    %c0_9 = arith.constant 0 : index
    %c0_10 = arith.constant 0 : index
    %19 = vector.load %arg4[%c0_9, %c0_10] : memref<24x1xf32, #tpu.memory_space<vmem>>, vector<24x1xf32>
    tpu.vector_store %arg4[%c0_9, %c0_10], %7 {strides = array<i32>} : memref<24x1xf32, #tpu.memory_space<vmem>>, vector<24x1xf32>,
    %c0_i32_11 = arith.constant 0 : i32
    %20 = arith.cmpi eq, %arg1, %c0_i32_11 : i32
    %21 = arith.extui %20 : i1 to i32
    %c0_i32_12 = arith.constant 0 : i32
    %22 = arith.cmpi ne, %21, %c0_i32_12 : i32
    scf.if %22 {
      %c0_13 = arith.constant 0 : index
      %c0_14 = arith.constant 0 : index
      %23 = vector.load %arg4[%c0_13, %c0_14] : memref<24x1xf32, #tpu.memory_space<vmem>>, vector<24x1xf32>
      %c0_15 = arith.constant 0 : index
      %c0_16 = arith.constant 0 : index
      %24 = vector.load %arg5[%c0_15, %c0_16] : memref<24x1xf32, #tpu.memory_space<vmem>>, vector<24x1xf32>
      %25 = math.log %24 : vector<24x1xf32>
      %26 = arith.addf %23, %25 : vector<24x1xf32>
      %c0_17 = arith.constant 0 : index
      %c0_18 = arith.constant 0 : index
      %27 = vector.load %arg6[%c0_17, %c0_18] : memref<24x1xf32, #tpu.memory_space<vmem>>, vector<24x1xf32>
      %28 = arith.subf %26, %27 : vector<24x1xf32>
      %c0_19 = arith.constant 0 : index
      %c0_20 = arith.constant 0 : index
      %29 = vector.load %arg3[%c0_19, %c0_20] : memref<24x1xf32, #tpu.memory_space<vmem>>, vector<24x1xf32>
      tpu.vector_store %arg3[%c0_19, %c0_20], %28 {strides = array<i32>} : memref<24x1xf32, #tpu.memory_space<vmem>>, vector<24x1xf32>,
    } else {
    }
    return
  }
  func.func @transform_0(%arg0: i32, %arg1: i32) -> (i32, i32) {
    %c0_i32 = arith.constant 0 : i32
    return %arg0, %arg1 : i32, i32
  }
  func.func @transform_1(%arg0: i32, %arg1: i32) -> (i32, i32) {
    %c0_i32 = arith.constant 0 : i32
    %c0_i32_0 = arith.constant 0 : i32
    return %arg0, %c0_i32 : i32, i32
  }
}

</mosaic_0001>

<llo_original>
// kernel: tpu_custom_call.1
$region0: #{tpu_custom_call.1}
  #allocation0 [shape = 'u32[]', space=smem, size = 0x4, offset = 0x4, fixed_abs, tag = 'smem constant byte address 0x4 - core index']
  #allocation1 [shape = 'u32[72,128]{1,0:T(1,128)}', space=vmem, size = 0x9000, scoped, tag = 'internal scratch']
  #allocation2 [shape = 'f32[24,1]{1,0:T(8,128)}', space=vmem, size = 0x3000, scoped, tag = 'scratch operand']
  #allocation3 [shape = 'f32[24,1]{1,0:T(8,128)}', space=vmem, size = 0x3000, scoped, tag = 'scratch operand']
  #allocation4 [shape = 'f32[24,1]{1,0:T(8,128)}', space=vmem, size = 0x3000, scoped, tag = 'scratch operand']
  %s0 = inlined_call_operand.hbm [shape: f32[24,160], index: 0, kind: input, shape index: {}]
  %s1 = inlined_call_operand.vmem [shape: f32[24,1], index: 1, kind: output, shape index: {}]
  %s2 = sld [smem:[#allocation0]]
  $region26: #{tpu_custom_call.1} parent=0
    _
  %s4 = ssub.s32 1, %s2
  %s5 = scalar_select 0, %s4, %s2
  $region1: #{tpu_custom_call.1} parent=0
    #allocation5 [shape = 'u8[24576]{0}', space=vmem, size = 0x6000, scoped, tag = 'input window, operand 0, single buffered']
    #allocation6 [shape = 's32[1]{0}', space=sflag, size = 0x4, scoped, tag = 'scoped memory for tpu_custom_call.1']
    %6 = vsyncpa [#allocation6], 0
    // Predicated region
    $region2: #{tpu_custom_call.1} parent=1 // pred_check
      _
    $region3: #{tpu_custom_call.1} parent=1 // pred_check_branch
      %8 = sbr.rel (0) target = $region5
    $region4: #{tpu_custom_call.1} parent=1 // pred_region
      %10 = vsyncadd [#allocation6], 0
      %s11 = sshll.u32 %s0, 4
      %s12 = int_to_ptr.hbm [resolvable:$true] %s11
      %s13 = sshll.u32 [#allocation5], 4
      %s14 = int_to_ptr.vmem [resolvable:$true] %s13
      %19 = dma.hbm_to_vmem [thread:$0]  %s12, 768, %s14, [#allocation6], 256, 256, 16
    $region5: #{tpu_custom_call.1} parent=1 // pred_fallthru
      _
    // Predicated region
    $region6: #{tpu_custom_call.1} parent=1 // pred_check
      _
    $region7: #{tpu_custom_call.1} parent=1 // pred_check_branch
      %21 = sbr.rel (0) target = $region9
    $region8: #{tpu_custom_call.1} parent=1 // pred_region
      %23 = dma.done [#allocation6], 768
    $region9: #{tpu_custom_call.1} parent=1 // pred_fallthru
      _
    %v24 = vld [vmem:[#allocation5] sm:$0xff]
    %v25 = vld [vmem:[#allocation5 + $0x8] sm:$0xff]
    %v26 = vld [vmem:[#allocation5 + $0x10] sm:$0xff]
    %v27 = vld [vmem:[#allocation5 + $0x18] sm:$0xff]
    %v28 = vld [vmem:[#allocation5 + $0x20] sm:$0xff]
    %v29 = vld [vmem:[#allocation5 + $0x28] sm:$0xff]
    %p30 = scmp.eq.s32.totalorder 0, 0
    // Predicated region
    $region10: #{tpu_custom_call.1} parent=1 // pred_check
      %p31 = pneg %p30
    $region11: #{tpu_custom_call.1} parent=1 // pred_check_branch
      %33 = sbr.rel (%p31) target = $region13
    $region12: #{tpu_custom_call.1} parent=1 // pred_region
      %vm34 = vcmask 7168
      %35 = vst.msk [vmem:[#allocation2] sm:$0xff] %vm34, -inf
      %36 = vst.msk [vmem:[#allocation2 + $0x8] sm:$0xff] %vm34, -inf
      %37 = vst.msk [vmem:[#allocation2 + $0x10] sm:$0xff] %vm34, -inf
      %38 = vst.msk [vmem:[#allocation3] sm:$0xff] %vm34, 0.0
      %39 = vst.msk [vmem:[#allocation3 + $0x8] sm:$0xff] %vm34, 0.0
      %40 = vst.msk [vmem:[#allocation3 + $0x10] sm:$0xff] %vm34, 0.0
      %41 = vst.msk [vmem:[#allocation4] sm:$0xff] %vm34, %v24
      %42 = vst.msk [vmem:[#allocation4 + $0x8] sm:$0xff] %vm34, %v26
      %43 = vst.msk [vmem:[#allocation4 + $0x10] sm:$0xff] %vm34, %v28
    $region13: #{tpu_custom_call.1} parent=1 // pred_fallthru
      _
    %v44 = vld [vmem:[#allocation2] sm:$0xff]
    %v45 = vld [vmem:[#allocation2 + $0x8] sm:$0xff]
    %v46 = vld [vmem:[#allocation2 + $0x10] sm:$0xff]
    %vm47 = vcmask 261120
    %v48 = vsel %vm47, %v25, -inf
    %v49 = vmax.f32 %v24, %v48
    %50 = vmax.xlane.f32.xlu0 %v49
    %v51 = vpop.xlane.xlu0 %50
    %v52 = vsel %vm47, %v27, -inf
    %v53 = vmax.f32 %v26, %v52
    %54 = vmax.xlane.f32.xlu0 %v53
    %v55 = vpop.xlane.xlu0 %54
    %v56 = vsel %vm47, %v29, -inf
    %v57 = vmax.f32 %v28, %v56
    %58 = vmax.xlane.f32.xlu0 %v57
    %v59 = vpop.xlane.xlu0 %58
    %v60 = vmax.f32 %v44, %v51
    %v61 = vmax.f32 %v45, %v55
    %v62 = vmax.f32 %v46, %v59
    %v63 = vld [vmem:[#allocation3] sm:$0xff]
    %v64 = vld [vmem:[#allocation3 + $0x8] sm:$0xff]
    %v65 = vld [vmem:[#allocation3 + $0x10] sm:$0xff]
    %v66 = vsub.f32 %v44, %v60
    %v67 = vsub.f32 %v45, %v61
    %v68 = vsub.f32 %v46, %v62
    %v69 = vmul.f32 %v66, 1.442695
    %v70 = vpow.pop %v69
    %v71 = vmul.f32 %v67, 1.442695
    %v72 = vpow.pop %v71
    %v73 = vmul.f32 %v68, 1.442695
    %v74 = vpow.pop %v73
    %v75 = vmul.f32 %v63, %v70
    %v76 = vmul.f32 %v64, %v72
    %v77 = vmul.f32 %v65, %v74
    %79 = vset.pattern.permute.xlu0 0
    %80 = vperm.xlu0 %79, %v60
    %v81 = vpop.permute.xlu0 %80
    %84 = vset.pattern.permute.xlu0 0
    %85 = vperm.xlu0 %84, %v61
    %v86 = vpop.permute.xlu0 %85
    %89 = vset.pattern.permute.xlu0 0
    %90 = vperm.xlu0 %89, %v62
    %v91 = vpop.permute.xlu0 %90
    %v93 = vsub.f32 %v24, %v81
    %v94 = vsub.f32 %v25, %v81
    %v95 = vsub.f32 %v26, %v86
    %v96 = vsub.f32 %v27, %v86
    %v97 = vsub.f32 %v28, %v91
    %v98 = vsub.f32 %v29, %v91
    %v99 = vmul.f32 %v93, 1.442695
    %v100 = vpow.pop %v99
    %v101 = vmul.f32 %v94, 1.442695
    %v102 = vpow.pop %v101
    %v103 = vmul.f32 %v95, 1.442695
    %v104 = vpow.pop %v103
    %v105 = vmul.f32 %v96, 1.442695
    %v106 = vpow.pop %v105
    %v107 = vmul.f32 %v97, 1.442695
    %v108 = vpow.pop %v107
    %v109 = vmul.f32 %v98, 1.442695
    %v110 = vpow.pop %v109
    %v111 = vsel %vm47, %v102, 0.0
    %v112 = vadd.f32 %v100, %v111
    %113 = vadd.xlane.f32.xlu0 %v112
    %v114 = vpop.xlane.xlu0 %113
    %v115 = vsel %vm47, %v106, 0.0
    %v116 = vadd.f32 %v104, %v115
    %117 = vadd.xlane.f32.xlu0 %v116
    %v118 = vpop.xlane.xlu0 %117
    %v119 = vsel %vm47, %v110, 0.0
    %v120 = vadd.f32 %v108, %v119
    %121 = vadd.xlane.f32.xlu0 %v120
    %v122 = vpop.xlane.xlu0 %121
    %v123 = vadd.f32 %v75, %v114
    %v124 = vadd.f32 %v76, %v118
    %v125 = vadd.f32 %v77, %v122
    %vm126 = vcmask 7168
    %127 = vst.msk [vmem:[#allocation3] sm:$0xff] %vm126, %v123
    %128 = vst.msk [vmem:[#allocation3 + $0x8] sm:$0xff] %vm126, %v124
    %129 = vst.msk [vmem:[#allocation3 + $0x10] sm:$0xff] %vm126, %v125
    %130 = vst.msk [vmem:[#allocation2] sm:$0xff] %vm126, %v60
    %131 = vst.msk [vmem:[#allocation2 + $0x8] sm:$0xff] %vm126, %v61
    %132 = vst.msk [vmem:[#allocation2 + $0x10] sm:$0xff] %vm126, %v62
    // Predicated region
    $region14: #{tpu_custom_call.1} parent=1 // pred_check
      %p133 = pneg %p30
    $region15: #{tpu_custom_call.1} parent=1 // pred_check_branch
      %135 = sbr.rel (%p133) target = $region17
    $region16: #{tpu_custom_call.1} parent=1 // pred_region
      %v136 = vld [vmem:[#allocation2] sm:$0xff]
      %v137 = vld [vmem:[#allocation2 + $0x8] sm:$0xff]
      %v138 = vld [vmem:[#allocation2 + $0x10] sm:$0xff]
      %v139 = vld [vmem:[#allocation3] sm:$0xff]
      %v140 = vld [vmem:[#allocation3 + $0x8] sm:$0xff]
      %v141 = vld [vmem:[#allocation3 + $0x10] sm:$0xff]
      %v142 = vlog2.pop %v139
      %v143 = vmul.f32 %v142, 0.6931472
      %v144 = vlog2.pop %v140
      %v145 = vmul.f32 %v144, 0.6931472
      %v146 = vlog2.pop %v141
      %v147 = vmul.f32 %v146, 0.6931472
      %v148 = vadd.f32 %v136, %v143
      %v149 = vadd.f32 %v137, %v145
      %v150 = vadd.f32 %v138, %v147
      %v151 = vld [vmem:[#allocation4] sm:$0xff]
      %v152 = vld [vmem:[#allocation4 + $0x8] sm:$0xff]
      %v153 = vld [vmem:[#allocation4 + $0x10] sm:$0xff]
      %v154 = vsub.f32 %v148, %v151
      %v155 = vsub.f32 %v149, %v152
      %v156 = vsub.f32 %v150, %v153
      %157 = vst.msk [vmem:[%s1] sm:$0xff] %vm126, %v154
      %158 = vst.msk [vmem:[%s1 + $0x8] sm:$0xff] %vm126, %v155
      %159 = vst.msk [vmem:[%s1 + $0x10] sm:$0xff] %vm126, %v156
    $region17: #{tpu_custom_call.1} parent=1 // pred_fallthru
      _
    // Predicated region
    $region18: #{tpu_custom_call.1} parent=1 // pred_check
      _
    $region19: #{tpu_custom_call.1} parent=1 // pred_check_branch
      %161 = sbr.rel (0) target = $region21
    $region20: #{tpu_custom_call.1} parent=1 // pred_region
      _
    $region21: #{tpu_custom_call.1} parent=1 // pred_fallthru
      _
    // Predicated region
    $region22: #{tpu_custom_call.1} parent=1 // pred_check
      _
    $region23: #{tpu_custom_call.1} parent=1 // pred_check_branch
      %163 = sbr.rel (0) target = $region25
    $region24: #{tpu_custom_call.1} parent=1 // pred_region
      _
    $region25: #{tpu_custom_call.1} parent=1 // pred_fallthru
      _
    %164 = vsyncpa [#allocation6], 1

</llo_original>
